<compile_context>
chip_gen: v6e
topology: v6e:2x2x1
jax: 0.10.0
libtpu: 0.0.40
codegen_flags: <defaults>
</compile_context>

<pallas_src>
import math

import jax
import jax.numpy as jnp
from jax import lax
from jax.experimental import pallas as pl
from jax.experimental.pallas import tpu as pltpu


def _complex_linear_sigmoid_kernel(xr_ref, xi_ref, wr_ref, wi_ref, br_ref, bi_ref,
                                   or_ref, oi_ref, acc_r, acc_i):
    """Grid = (batch tiles, N tiles, K tiles).  K (reduction) is the last axis."""
    k = pl.program_id(2)

    @pl.when(k == 0)
    def _init():
        acc_r[...] = jnp.zeros_like(acc_r)
        acc_i[...] = jnp.zeros_like(acc_i)

    xr = xr_ref[...]
    xi = xi_ref[...]
    wr = wr_ref[...]
    wi = wi_ref[...]
    # Complex matmul as 4 real bf16 MXU matmuls, accumulated in f32.
    acc_r[...] += (jnp.dot(xr, wr, preferred_element_type=jnp.float32)
                   - jnp.dot(xi, wi, preferred_element_type=jnp.float32))
    acc_i[...] += (jnp.dot(xr, wi, preferred_element_type=jnp.float32)
                   + jnp.dot(xi, wr, preferred_element_type=jnp.float32))

    @pl.when(k == pl.num_programs(2) - 1)
    def _finalize():
        yr = acc_r[...] + br_ref[...]          # bias kept in f32
        yi = acc_i[...] + bi_ref[...]
        # Numerically stable complex sigmoid  sigma(z) = 1 / (1 + exp(-z)),  z = yr + i*yi
        #   t   = exp(-|yr|) in (0, 1]                    (never overflows)
        #   den = 1 + 2 t cos(yi) + t^2
        #   num_r = (yr >= 0 ? 1 : t^2) + t cos(yi) ;  num_i = t sin(yi)
        t = jnp.exp(-jnp.abs(yr))
        c = jnp.cos(yi)
        s = jnp.sin(yi)
        tc = t * c
        den = 1.0 + 2.0 * tc + t * t
        # approx reciprocal -> EUP slot; exact pole z = i*pi*(2k+1) diverges in the
        # reference too, so the approximation only matters for adversarial inputs.
        inv_den = pl.reciprocal(den, approx=True)
        num_r = jnp.where(yr >= 0.0, 1.0, t * t) + tc
        or_ref[...] = num_r * inv_den
        oi_ref[...] = (t * s) * inv_den


def _pick_block(total: int, target: int, align: int) -> int:
    """Largest multiple of `align` dividing `total` and <= target; else `total` (full dim)."""
    if total <= target:
        return total
    b = (min(target, total) // align) * align
    while b >= align:
        if total % b == 0:
            return b
        b -= align
    return total


def complex_linear_sigmoid(xr, xi, wr, wi, br, bi, *, bm=None, bn=None, bk=None):
    """xr, xi: (B, D) bf16; wr, wi: (D, D) bf16 in (in, out) layout; br, bi: (1, D) f32.

    Returns (out_r, out_i), each (B, D) f32.
    """
    B, D = xr.shape
    assert wr.shape == (D, D) and wi.shape == (D, D)
    assert br.shape == (1, D) and bi.shape == (1, D)

    # MXU-friendly defaults: fill the M dim (<=256, multiple of 8), lane-aligned
    # (multiple of 128) N/K tiles so the weight streams in bounded tiles.
    bm = _pick_block(B, 256, 8) if bm is None else bm
    bn = _pick_block(D, 512, 128) if bn is None else bn
    bk = _pick_block(D, 512, 128) if bk is None else bk
    assert B % bm == 0 and D % bn == 0 and D % bk == 0
    grid = (B // bm, D // bn, D // bk)

    # Conservative per-step VMEM bound (assume double-buffering everywhere).
    est = (2 * 2 * bm * bk * 2        # xr, xi tiles (bf16)
           + 2 * 2 * bk * bn * 2      # wr, wi tiles (bf16)
           + 2 * 2 * 8 * bn * 4       # br, bi (f32, sublane-padded)
           + 2 * 2 * bm * bn * 4      # out_r, out_i tiles (f32)
           + 2 * bm * bn * 4)         # f32 accumulator scratch
    vmem_limit = int(min(max(2 * est, 32 << 20), 64 << 20))

    x_spec = pl.BlockSpec((bm, bk), lambda i, j, k: (i, k))
    w_spec = pl.BlockSpec((bk, bn), lambda i, j, k: (k, j))
    b_spec = pl.BlockSpec((1, bn), lambda i, j, k: (0, j))
    o_spec = pl.BlockSpec((bm, bn), lambda i, j, k: (i, j))

    return pl.pallas_call(
        _complex_linear_sigmoid_kernel,
        out_shape=(jax.ShapeDtypeStruct((B, D), jnp.float32),
                   jax.ShapeDtypeStruct((B, D), jnp.float32)),
        grid_spec=pltpu.PrefetchScalarGridSpec(
            num_scalar_prefetch=0,
            grid=grid,
            in_specs=[x_spec, x_spec, w_spec, w_spec, b_spec, b_spec],
            out_specs=[o_spec, o_spec],
            scratch_shapes=[pltpu.VMEM((bm, bn), jnp.float32),
                            pltpu.VMEM((bm, bn), jnp.float32)]),
        compiler_params=pltpu.CompilerParams(
            dimension_semantics=("parallel", "parallel", "arbitrary"),
            vmem_limit_bytes=vmem_limit),
    )(xr, xi, wr, wi, br, bi)


def init_params(key, n_qubit):
    """Emulates torch nn.Linear(D, D).to(cfloat) init; weights stored (in, out) = W^T."""
    D = 2 ** n_qubit * 2
    k1, k2, k3, k4 = jax.random.split(key, 4)
    bound = 1.0 / math.sqrt(D)
    wr = jax.random.uniform(k1, (D, D), jnp.float32, -bound, bound)   # (in, out)
    wi = jax.random.uniform(k2, (D, D), jnp.float32, -bound, bound)
    br = jax.random.uniform(k3, (1, D), jnp.float32, -bound, bound)
    bi = jax.random.uniform(k4, (1, D), jnp.float32, -bound, bound)
    return wr, wi, br, bi


def prepare_params(wr, wi, br, bi):
    """Kernel-ready params: bf16 weights, f32 bias.

    NOTE: wr/wi must already be in (in, out) layout.  Weights imported from a
    PyTorch nn.Linear (stored (out, in)) must be transposed first: wr = W.real.T, etc.
    """
    D = wr.shape[0]
    assert wr.shape == (D, D) and wi.shape == (D, D), "square (in, out) weights expected"
    assert br.shape == (1, D) and bi.shape == (1, D)
    return (wr.astype(jnp.bfloat16), wi.astype(jnp.bfloat16),
            br.astype(jnp.float32), bi.astype(jnp.float32))


def neural_network_model_forward(s1, s2, params):
    """s1, s2: (B, 2**n_qubit) complex64 -> (B, 2*2**n_qubit) complex64."""
    wr_b, wi_b, br, bi = params
    # Implicit torch.cat + Re/Im extraction (Mosaic has no complex refs); bf16 for the MXU.
    xr = jnp.concatenate([jnp.real(s1), jnp.real(s2)], axis=-1).astype(jnp.bfloat16)
    xi = jnp.concatenate([jnp.imag(s1), jnp.imag(s2)], axis=-1).astype(jnp.bfloat16)
    out_r, out_i = complex_linear_sigmoid(xr, xi, wr_b, wi_b, br, bi)
    return lax.complex(out_r, out_i)


if __name__ == "__main__":
    n_qubit = 4                      # Linear width D = 2^4 * 2 = 32
    B = 8
    half = 2 ** n_qubit
    D = 2 * half

    key = jax.random.PRNGKey(0)
    kp, k1r, k1i, k2r, k2i = jax.random.split(key, 5)
    wr, wi, br, bi = init_params(kp, n_qubit)
    params = prepare_params(wr, wi, br, bi)

    s1 = (jax.random.normal(k1r, (B, half), jnp.float32)
          + 1j * jax.random.normal(k1i, (B, half), jnp.float32)).astype(jnp.complex64)
    s2 = (jax.random.normal(k2r, (B, half), jnp.float32)
          + 1j * jax.random.normal(k2i, (B, half), jnp.float32)).astype(jnp.complex64)

    fwd = jax.jit(neural_network_model_forward)
    out = jax.block_until_ready(fwd(s1, s2, params))

    # pure-JAX f32 complex reference of the complex Linear + complex Sigmoid
    W = (wr + 1j * wi).astype(jnp.complex64)      # (in, out) layout
    b = (br + 1j * bi).astype(jnp.complex64)[0]
    s = jnp.concatenate([s1, s2], axis=-1)
    ref = 1.0 / (1.0 + jnp.exp(-(s @ W + b)))

    assert out.shape == (B, D) and out.dtype == jnp.complex64
    # Tolerance covers the bf16 matmul operands (f32 accumulation) + approx reciprocal.
    max_err = float(jnp.max(jnp.abs(out - ref)))
    assert jnp.allclose(out, ref, atol=3e-2, rtol=3e-2), "max abs err = %e" % max_err

    print("KERNEL_OK")
</pallas_src>

<mosaic_0001>
module attributes {stable_mosaic.version = 11 : i64} {
  func.func @_complex_linear_sigmoid_kernel(%arg0: i32, %arg1: i32, %arg2: i32, %arg3: memref<8x32xbf16, #tpu.memory_space<vmem>>, %arg4: memref<8x32xbf16, #tpu.memory_space<vmem>>, %arg5: memref<32x32xbf16, #tpu.memory_space<vmem>>, %arg6: memref<32x32xbf16, #tpu.memory_space<vmem>>, %arg7: memref<1x32xf32, #tpu.memory_space<vmem>>, %arg8: memref<1x32xf32, #tpu.memory_space<vmem>>, %arg9: memref<8x32xf32, #tpu.memory_space<vmem>>, %arg10: memref<8x32xf32, #tpu.memory_space<vmem>>, %arg11: memref<8x32xf32, #tpu.memory_space<vmem>>, %arg12: memref<8x32xf32, #tpu.memory_space<vmem>>) attributes {dimension_semantics = [#tpu.dimension_semantics<parallel>, #tpu.dimension_semantics<parallel>, #tpu.dimension_semantics<arbitrary>], iteration_bounds = array<i64: 1, 1, 1>, scalar_prefetch = 0 : i64, scratch_operands = 2 : i64, tpu.core_type = #tpu.core_type<tc>, window_params = [{transform_indices = @transform_0, window_bounds = array<i64: 8, 32>}, {transform_indices = @transform_1, window_bounds = array<i64: 8, 32>}, {transform_indices = @transform_2, window_bounds = array<i64: 32, 32>}, {transform_indices = @transform_3, window_bounds = array<i64: 32, 32>}, {transform_indices = @transform_4, window_bounds = array<i64: 1, 32>}, {transform_indices = @transform_5, window_bounds = array<i64: 1, 32>}, {transform_indices = @transform_6, window_bounds = array<i64: 8, 32>}, {transform_indices = @transform_7, window_bounds = array<i64: 8, 32>}]} {
    %c0_i32 = arith.constant 0 : i32
    %0 = arith.cmpi eq, %arg2, %c0_i32 : i32
    %1 = arith.extui %0 : i1 to i32
    %c0_i32_0 = arith.constant 0 : i32
    %2 = arith.cmpi ne, %1, %c0_i32_0 : i32
    scf.if %2 {
      %cst_21 = arith.constant 0.000000e+00 : f32
      %22 = vector.broadcast %cst_21 : f32 to vector<8x32xf32>
      %c0_22 = arith.constant 0 : index
      %c0_23 = arith.constant 0 : index
      %23 = vector.load %arg11[%c0_22, %c0_23] : memref<8x32xf32, #tpu.memory_space<vmem>>, vector<8x32xf32>
      tpu.vector_store %arg11[%c0_22, %c0_23], %22 {strides = array<i32>} : memref<8x32xf32, #tpu.memory_space<vmem>>, vector<8x32xf32>,
      %cst_24 = arith.constant 0.000000e+00 : f32
      %24 = vector.broadcast %cst_24 : f32 to vector<8x32xf32>
      %c0_25 = arith.constant 0 : index
      %c0_26 = arith.constant 0 : index
      %25 = vector.load %arg12[%c0_25, %c0_26] : memref<8x32xf32, #tpu.memory_space<vmem>>, vector<8x32xf32>
      tpu.vector_store %arg12[%c0_25, %c0_26], %24 {strides = array<i32>} : memref<8x32xf32, #tpu.memory_space<vmem>>, vector<8x32xf32>,
    } else {
    }
    %c0 = arith.constant 0 : index
    %c0_1 = arith.constant 0 : index
    %3 = vector.load %arg3[%c0, %c0_1] : memref<8x32xbf16, #tpu.memory_space<vmem>>, vector<8x32xbf16>
    %c0_2 = arith.constant 0 : index
    %c0_3 = arith.constant 0 : index
    %4 = vector.load %arg4[%c0_2, %c0_3] : memref<8x32xbf16, #tpu.memory_space<vmem>>, vector<8x32xbf16>
    %c0_4 = arith.constant 0 : index
    %c0_5 = arith.constant 0 : index
    %5 = vector.load %arg5[%c0_4, %c0_5] : memref<32x32xbf16, #tpu.memory_space<vmem>>, vector<32x32xbf16>
    %c0_6 = arith.constant 0 : index
    %c0_7 = arith.constant 0 : index
    %6 = vector.load %arg6[%c0_6, %c0_7] : memref<32x32xbf16, #tpu.memory_space<vmem>>, vector<32x32xbf16>
    %c0_8 = arith.constant 0 : index
    %c0_9 = arith.constant 0 : index
    %7 = vector.load %arg11[%c0_8, %c0_9] : memref<8x32xf32, #tpu.memory_space<vmem>>, vector<8x32xf32>
    %cst = arith.constant dense<0.000000e+00> : vector<8x32xf32>
    %8 = tpu.matmul %3, %5, %cst {dimension_numbers = #tpu.dot_dimension_numbers<[1], [0], [0], [1], [0, 0, 1, 1], [], []>} : vector<8x32xbf16>, vector<32x32xbf16>, vector<8x32xf32> -> vector<8x32xf32>
    %cst_10 = arith.constant dense<0.000000e+00> : vector<8x32xf32>
    %9 = tpu.matmul %4, %6, %cst_10 {dimension_numbers = #tpu.dot_dimension_numbers<[1], [0], [0], [1], [0, 0, 1, 1], [], []>} : vector<8x32xbf16>, vector<32x32xbf16>, vector<8x32xf32> -> vector<8x32xf32>
    %10 = arith.subf %8, %9 : vector<8x32xf32>
    %11 = arith.addf %7, %10 : vector<8x32xf32>
    %c0_11 = arith.constant 0 : index
    %c0_12 = arith.constant 0 : index
    %12 = vector.load %arg11[%c0_11, %c0_12] : memref<8x32xf32, #tpu.memory_space<vmem>>, vector<8x32xf32>
    tpu.vector_store %arg11[%c0_11, %c0_12], %11 {strides = array<i32>} : memref<8x32xf32, #tpu.memory_space<vmem>>, vector<8x32xf32>,
    %c0_13 = arith.constant 0 : index
    %c0_14 = arith.constant 0 : index
    %13 = vector.load %arg12[%c0_13, %c0_14] : memref<8x32xf32, #tpu.memory_space<vmem>>, vector<8x32xf32>
    %cst_15 = arith.constant dense<0.000000e+00> : vector<8x32xf32>
    %14 = tpu.matmul %3, %6, %cst_15 {dimension_numbers = #tpu.dot_dimension_numbers<[1], [0], [0], [1], [0, 0, 1, 1], [], []>} : vector<8x32xbf16>, vector<32x32xbf16>, vector<8x32xf32> -> vector<8x32xf32>
    %cst_16 = arith.constant dense<0.000000e+00> : vector<8x32xf32>
    %15 = tpu.matmul %4, %5, %cst_16 {dimension_numbers = #tpu.dot_dimension_numbers<[1], [0], [0], [1], [0, 0, 1, 1], [], []>} : vector<8x32xbf16>, vector<32x32xbf16>, vector<8x32xf32> -> vector<8x32xf32>
    %16 = arith.addf %14, %15 : vector<8x32xf32>
    %17 = arith.addf %13, %16 : vector<8x32xf32>
    %c0_17 = arith.constant 0 : index
    %c0_18 = arith.constant 0 : index
    %18 = vector.load %arg12[%c0_17, %c0_18] : memref<8x32xf32, #tpu.memory_space<vmem>>, vector<8x32xf32>
    tpu.vector_store %arg12[%c0_17, %c0_18], %17 {strides = array<i32>} : memref<8x32xf32, #tpu.memory_space<vmem>>, vector<8x32xf32>,
    %c0_i32_19 = arith.constant 0 : i32
    %19 = arith.cmpi eq, %arg2, %c0_i32_19 : i32
    %20 = arith.extui %19 : i1 to i32
    %c0_i32_20 = arith.constant 0 : i32
    %21 = arith.cmpi ne, %20, %c0_i32_20 : i32
    scf.if %21 {
      %c0_21 = arith.constant 0 : index
      %c0_22 = arith.constant 0 : index
      %22 = vector.load %arg11[%c0_21, %c0_22] : memref<8x32xf32, #tpu.memory_space<vmem>>, vector<8x32xf32>
      %c0_23 = arith.constant 0 : index
      %c0_24 = arith.constant 0 : index
      %23 = vector.load %arg7[%c0_23, %c0_24] : memref<1x32xf32, #tpu.memory_space<vmem>>, vector<1x32xf32>
      %24 = vector.broadcast %23 : vector<1x32xf32> to vector<8x32xf32>
      %25 = arith.addf %22, %24 : vector<8x32xf32>
      %c0_25 = arith.constant 0 : index
      %c0_26 = arith.constant 0 : index
      %26 = vector.load %arg12[%c0_25, %c0_26] : memref<8x32xf32, #tpu.memory_space<vmem>>, vector<8x32xf32>
      %c0_27 = arith.constant 0 : index
      %c0_28 = arith.constant 0 : index
      %27 = vector.load %arg8[%c0_27, %c0_28] : memref<1x32xf32, #tpu.memory_space<vmem>>, vector<1x32xf32>
      %28 = vector.broadcast %27 : vector<1x32xf32> to vector<8x32xf32>
      %29 = arith.addf %26, %28 : vector<8x32xf32>
      %30 = math.absf %25 : vector<8x32xf32>
      %cst_29 = arith.constant 0.000000e+00 : f32
      %31 = vector.broadcast %cst_29 : f32 to vector<8x32xf32>
      %32 = arith.subf %31, %30 : vector<8x32xf32>
      %33 = math.exp %32 : vector<8x32xf32>
      %34 = math.cos %29 : vector<8x32xf32>
      %35 = math.sin %29 : vector<8x32xf32>
      %36 = arith.mulf %33, %34 : vector<8x32xf32>
      %cst_30 = arith.constant 2.000000e+00 : f32
      %37 = vector.broadcast %cst_30 : f32 to vector<8x32xf32>
      %38 = arith.mulf %37, %36 : vector<8x32xf32>
      %cst_31 = arith.constant 1.000000e+00 : f32
      %39 = vector.broadcast %cst_31 : f32 to vector<8x32xf32>
      %40 = arith.addf %39, %38 : vector<8x32xf32>
      %41 = arith.mulf %33, %33 : vector<8x32xf32>
      %42 = arith.addf %40, %41 : vector<8x32xf32>
      %43 = tpu.reciprocal %42 {approx = true} : vector<8x32xf32> -> vector<8x32xf32>
      %cst_32 = arith.constant 0.000000e+00 : f32
      %44 = vector.broadcast %cst_32 : f32 to vector<8x32xf32>
      %45 = arith.cmpf oge, %25, %44 : vector<8x32xf32>
      %46 = arith.mulf %33, %33 : vector<8x32xf32>
      %cst_33 = arith.constant 1.000000e+00 : f32
      %47 = vector.broadcast %cst_33 : f32 to vector<8x32xf32>
      %48 = arith.select %45, %47, %46 : vector<8x32xi1>, vector<8x32xf32>
      %49 = arith.addf %48, %36 : vector<8x32xf32>
      %50 = arith.mulf %49, %43 : vector<8x32xf32>
      %c0_34 = arith.constant 0 : index
      %c0_35 = arith.constant 0 : index
      %51 = vector.load %arg9[%c0_34, %c0_35] : memref<8x32xf32, #tpu.memory_space<vmem>>, vector<8x32xf32>
      tpu.vector_store %arg9[%c0_34, %c0_35], %50 {strides = array<i32>} : memref<8x32xf32, #tpu.memory_space<vmem>>, vector<8x32xf32>,
      %52 = arith.mulf %33, %35 : vector<8x32xf32>
      %53 = arith.mulf %52, %43 : vector<8x32xf32>
      %c0_36 = arith.constant 0 : index
      %c0_37 = arith.constant 0 : index
      %54 = vector.load %arg10[%c0_36, %c0_37] : memref<8x32xf32, #tpu.memory_space<vmem>>, vector<8x32xf32>
      tpu.vector_store %arg10[%c0_36, %c0_37], %53 {strides = array<i32>} : memref<8x32xf32, #tpu.memory_space<vmem>>, vector<8x32xf32>,
    } else {
    }
    return
  }
  func.func @transform_0(%arg0: i32, %arg1: i32, %arg2: i32) -> (i32, i32) {
    %c0_i32 = arith.constant 0 : i32
    return %arg0, %arg2 : i32, i32
  }
  func.func @transform_1(%arg0: i32, %arg1: i32, %arg2: i32) -> (i32, i32) {
    %c0_i32 = arith.constant 0 : i32
    return %arg0, %arg2 : i32, i32
  }
  func.func @transform_2(%arg0: i32, %arg1: i32, %arg2: i32) -> (i32, i32) {
    %c0_i32 = arith.constant 0 : i32
    return %arg2, %arg1 : i32, i32
  }
  func.func @transform_3(%arg0: i32, %arg1: i32, %arg2: i32) -> (i32, i32) {
    %c0_i32 = arith.constant 0 : i32
    return %arg2, %arg1 : i32, i32
  }
  func.func @transform_4(%arg0: i32, %arg1: i32, %arg2: i32) -> (i32, i32) {
    %c0_i32 = arith.constant 0 : i32
    %c0_i32_0 = arith.constant 0 : i32
    return %c0_i32, %arg1 : i32, i32
  }
  func.func @transform_5(%arg0: i32, %arg1: i32, %arg2: i32) -> (i32, i32) {
    %c0_i32 = arith.constant 0 : i32
    %c0_i32_0 = arith.constant 0 : i32
    return %c0_i32, %arg1 : i32, i32
  }
  func.func @transform_6(%arg0: i32, %arg1: i32, %arg2: i32) -> (i32, i32) {
    %c0_i32 = arith.constant 0 : i32
    return %arg0, %arg1 : i32, i32
  }
  func.func @transform_7(%arg0: i32, %arg1: i32, %arg2: i32) -> (i32, i32) {
    %c0_i32 = arith.constant 0 : i32
    return %arg0, %arg1 : i32, i32
  }
}

</mosaic_0001>

<llo_original>
// kernel: custom-call
$region0: #{custom-call}
  %s0 = inlined_call_operand.hbm [shape: c64[8,16], index: 0, kind: input, shape index: {}]
  %s1 = inlined_call_operand.vmem [shape: f32[8,16], index: 1, kind: output, shape index: {}]
  $region1: #{custom-call} parent=0
    #allocation0 [shape = 's32[1]{0}', space=sflag, size = 0x4, scoped, tag = 'scoped memory for custom-call']
    %2 = vsyncpa [#allocation0], 0
    %s3 = sshll.u32 %s1, 4
    %s4 = int_to_ptr.vmem [resolvable:$true] %s3
    %6 = dma.hbm_to_vmem [thread:$0]  %s0, 128, %s4, [#allocation0]
    %7 = dma.done [#allocation0], 128
    %8 = vsyncpa [#allocation0], 1

// kernel: custom-call.1
$region0: #{custom-call.1}
  %s0 = inlined_call_operand.hbm [shape: c64[8,16], index: 0, kind: input, shape index: {}]
  %s1 = inlined_call_operand.vmem [shape: f32[8,16], index: 1, kind: output, shape index: {}]
  %s2 = scalar_lea.hbm %s0, 128
  $region1: #{custom-call.1} parent=0
    #allocation0 [shape = 's32[1]{0}', space=sflag, size = 0x4, scoped, tag = 'scoped memory for custom-call.1']
    %3 = vsyncpa [#allocation0], 0
    %s4 = sshll.u32 %s1, 4
    %s5 = int_to_ptr.vmem [resolvable:$true] %s4
    %7 = dma.hbm_to_vmem [thread:$0]  %s2, 128, %s5, [#allocation0]
    %8 = dma.done [#allocation0], 128
    %9 = vsyncpa [#allocation0], 1

// kernel: custom-call.4
$region0: #{custom-call.4}
  %s0 = inlined_call_operand.vmem [shape: f32[8,32], index: 0, kind: input, shape index: {}]
  %s1 = inlined_call_operand.vmem [shape: f32[8,32], index: 1, kind: input, shape index: {}]
  %s2 = inlined_call_operand.hbm [shape: c64[8,32], index: 2, kind: output, shape index: {}]
  %s3 = scalar_lea.hbm %s2, 128
  $region1: #{custom-call.4} parent=0
    #allocation0 [shape = 's32[1]{0}', space=sflag, size = 0x4, scoped, tag = 'scoped memory for custom-call.4']
    %4 = vsyncpa [#allocation0], 0
    %s5 = sshll.u32 %s0, 4
    %s6 = int_to_ptr.vmem [resolvable:$true] %s5
    %8 = dma.vmem_to_hbm [thread:$0]  %s6, 128, %s2, [#allocation0]
    %9 = dma.done [#allocation0], 128
    %10 = vsyncpa [#allocation0], 1
  $region2: #{custom-call.4} parent=0
    #allocation1 [shape = 's32[1]{0}', space=sflag, size = 0x4, scoped, tag = 'scoped memory for custom-call.4']
    %11 = vsyncpa [#allocation1], 0
    %s12 = sshll.u32 %s1, 4
    %s13 = int_to_ptr.vmem [resolvable:$true] %s12
    %15 = dma.vmem_to_hbm [thread:$0]  %s13, 128, %s3, [#allocation1]
    %16 = dma.done [#allocation1], 128
    %17 = vsyncpa [#allocation1], 1

// kernel: neural_network_model_forward.1
$region0: #{neural_network_model_forward.1}
  #allocation0 [shape = 'u32[]', space=smem, size = 0x4, offset = 0x4, fixed_abs, tag = 'smem constant byte address 0x4 - core index']
  #allocation1 [shape = 'u32[144,128]{1,0:T(1,128)}', space=vmem, size = 0x12000, scoped, tag = 'internal scratch']
  #allocation2 [shape = 'f32[8,32]{1,0:T(8,128)}', space=vmem, size = 0x1000, scoped, tag = 'scratch operand']
  #allocation3 [shape = 'f32[8,32]{1,0:T(8,128)}', space=vmem, size = 0x1000, scoped, tag = 'scratch operand']
  %s0 = inlined_call_operand.vmem [shape: bf16[8,32], index: 0, kind: input, shape index: {}]
  %s1 = inlined_call_operand.vmem [shape: bf16[8,32], index: 1, kind: input, shape index: {}]
  %s2 = inlined_call_operand.vmem [shape: bf16[32,32], index: 2, kind: input, shape index: {}]
  %s3 = inlined_call_operand.vmem [shape: bf16[32,32], index: 3, kind: input, shape index: {}]
  %s4 = inlined_call_operand.vmem [shape: f32[1,32], index: 4, kind: input, shape index: {}]
  %s5 = inlined_call_operand.vmem [shape: f32[1,32], index: 5, kind: input, shape index: {}]
  %s6 = inlined_call_operand.vmem [shape: f32[8,32], index: 6, kind: output, shape index: {0}]
  %s7 = inlined_call_operand.vmem [shape: f32[8,32], index: 7, kind: output, shape index: {1}]
  %8 = xla_tuple %s6, %s7
  %s9 = sld [smem:[#allocation0]]
  $region50: #{neural_network_model_forward.1} parent=0
    _
  %s11 = ssub.s32 1, %s9
  %s12 = scalar_select 0, %s11, %s9
  // Predicated region
  $region2: #{neural_network_model_forward.1} parent=0 // pred_check
    _
  $region3: #{neural_network_model_forward.1} parent=0 // pred_check_branch
    %14 = sbr.rel (0) target = $region5
  $region4: #{neural_network_model_forward.1} parent=0 // pred_region
    _
  $region5: #{neural_network_model_forward.1} parent=0 // pred_fallthru
    _
  // Predicated region
  $region6: #{neural_network_model_forward.1} parent=0 // pred_check
    _
  $region7: #{neural_network_model_forward.1} parent=0 // pred_check_branch
    %16 = sbr.rel (0) target = $region9
  $region8: #{neural_network_model_forward.1} parent=0 // pred_region
    _
  $region9: #{neural_network_model_forward.1} parent=0 // pred_fallthru
    _
  // Predicated region
  $region10: #{neural_network_model_forward.1} parent=0 // pred_check
    _
  $region11: #{neural_network_model_forward.1} parent=0 // pred_check_branch
    %18 = sbr.rel (0) target = $region13
  $region12: #{neural_network_model_forward.1} parent=0 // pred_region
    _
  $region13: #{neural_network_model_forward.1} parent=0 // pred_fallthru
    _
  // Predicated region
  $region14: #{neural_network_model_forward.1} parent=0 // pred_check
    _
  $region15: #{neural_network_model_forward.1} parent=0 // pred_check_branch
    %20 = sbr.rel (0) target = $region17
  $region16: #{neural_network_model_forward.1} parent=0 // pred_region
    _
  $region17: #{neural_network_model_forward.1} parent=0 // pred_fallthru
    _
  // Predicated region
  $region18: #{neural_network_model_forward.1} parent=0 // pred_check
    _
  $region19: #{neural_network_model_forward.1} parent=0 // pred_check_branch
    %22 = sbr.rel (0) target = $region21
  $region20: #{neural_network_model_forward.1} parent=0 // pred_region
    _
  $region21: #{neural_network_model_forward.1} parent=0 // pred_fallthru
    _
  // Predicated region
  $region22: #{neural_network_model_forward.1} parent=0 // pred_check
    _
  $region23: #{neural_network_model_forward.1} parent=0 // pred_check_branch
    %24 = sbr.rel (0) target = $region25
  $region24: #{neural_network_model_forward.1} parent=0 // pred_region
    _
  $region25: #{neural_network_model_forward.1} parent=0 // pred_fallthru
    _
  %p26 = scmp.eq.s32.totalorder 0, 0
  // Predicated region
  $region26: #{neural_network_model_forward.1} parent=0 // pred_check
    %p27 = pneg %p26
  $region27: #{neural_network_model_forward.1} parent=0 // pred_check_branch
    %29 = sbr.rel (%p27) target = $region29
  $region28: #{neural_network_model_forward.1} parent=0 // pred_region
    %vm30 = vcmask 261120
    %31 = vst.msk [vmem:[#allocation2] sm:$0xff] %vm30, 0.0
    %32 = vst.msk [vmem:[#allocation3] sm:$0xff] %vm30, 0.0
  $region29: #{neural_network_model_forward.1} parent=0 // pred_fallthru
    _
  %v33 = vld [vmem:[%s0] sm:$0xf]
  %v34 = vld [vmem:[%s1] sm:$0xf]
  %v35 = vld [vmem:[%s2] sm:$0xf]
  %v36 = vld [vmem:[%s2 + $0x4] sm:$0xf]
  %v37 = vld [vmem:[%s2 + $0x8] sm:$0xf]
  %v38 = vld [vmem:[%s2 + $0xc] sm:$0xf]
  %v39 = vld [vmem:[%s3] sm:$0xf]
  %v40 = vld [vmem:[%s3 + $0x4] sm:$0xf]
  %v41 = vld [vmem:[%s3 + $0x8] sm:$0xf]
  %v42 = vld [vmem:[%s3 + $0xc] sm:$0xf]
  %v43 = vld [vmem:[#allocation2] sm:$0xff]
  %v48 = vunpack.c.l.b16 %v35
  %v49 = vunpack.c.l.b16 %v36
  %v50 = vunpack.c.l.b16 %v37
  %v51 = vunpack.c.l.b16 %v38
  %v52 = vpack.c.b16 %v49, %v48
  %v53 = vpack.c.b16 %v51, %v50
  %vm56 = vcmask 261120
  %v58 = vsel %vm56, %v33, 0
  %60 = vmatprep.subr.bf16.mxu0 0
  %61 = vmatpush1.bf16.msra.mxu0 0
  %62 = vmatprep.subr.bf16.mxu0 0
  %63 = vmatpush1.bf16.msra.mxu0 0
  %64 = vmatprep.subr.bf16.mxu0 0
  %65 = vmatpush1.bf16.msra.mxu0 0
  %66 = vmatprep.subr.bf16.mxu0 0
  %67 = vmatpush1.bf16.msra.mxu0 0
  %68 = vmatprep.subr.bf16.mxu0 0
  %69 = vmatpush1.bf16.msra.mxu0 0
  %70 = vmatprep.subr.bf16.mxu0 0
  %71 = vmatpush1.bf16.msra.mxu0 0
  %72 = vmatprep.subr.bf16.mxu0 0
  %73 = vmatpush1.bf16.msra.mxu0 %v53
  %74 = vmatprep.subr.bf16.mxu0 0
  %75 = vmatpush1.bf16.msra.mxu0 %v52
  %76 = vmatprep.subr.bf16.mxu0 0
  %77 = vmatpush2.bf16.msra.mxu0 0
  %78 = vmatprep.subr.bf16.mxu0 0
  %79 = vmatpush2.bf16.msra.mxu0 0
  %80 = vmatprep.subr.bf16.mxu0 0
  %81 = vmatpush2.bf16.msra.mxu0 0
  %82 = vmatprep.subr.bf16.mxu0 0
  %83 = vmatpush2.bf16.msra.mxu0 0
  %84 = vmatprep.subr.bf16.mxu0 0
  %85 = vmatpush2.bf16.msra.mxu0 0
  %86 = vmatprep.subr.bf16.mxu0 0
  %87 = vmatpush2.bf16.msra.mxu0 0
  %88 = vmatprep.subr.bf16.mxu0 0
  %89 = vmatpush2.bf16.msra.mxu0 0
  %90 = vmatprep.subr.bf16.mxu0 0
  %91 = vmatpush2.bf16.msra.mxu0 0
  %92 = vmatprep.mubr.bf16.mxu0 0
  %93 = vmatmul.mubr.bf16.gmra.mxu0 %v58
  %v94 = vpop.f32.mrf.mxu0
  %v95 = vadd.f32 0.0, %v94
  %v96 = vpop.f32.mrf.mxu0
  %v97 = vpop.f32.mrf.mxu0
  %v98 = vpop.f32.mrf.mxu0
  %99 = vdwg.mxu0
  %v104 = vunpack.c.l.b16 %v39
  %v105 = vunpack.c.l.b16 %v40
  %v106 = vunpack.c.l.b16 %v41
  %v107 = vunpack.c.l.b16 %v42
  %v108 = vpack.c.b16 %v105, %v104
  %v109 = vpack.c.b16 %v107, %v106
  %v113 = vsel %vm56, %v34, 0
  %115 = vmatprep.subr.bf16.mxu0 0
  %116 = vmatpush1.bf16.msra.mxu0 0
  %117 = vmatprep.subr.bf16.mxu0 0
  %118 = vmatpush1.bf16.msra.mxu0 0
  %119 = vmatprep.subr.bf16.mxu0 0
  %120 = vmatpush1.bf16.msra.mxu0 0
  %121 = vmatprep.subr.bf16.mxu0 0
  %122 = vmatpush1.bf16.msra.mxu0 0
  %123 = vmatprep.subr.bf16.mxu0 0
  %124 = vmatpush1.bf16.msra.mxu0 0
  %125 = vmatprep.subr.bf16.mxu0 0
  %126 = vmatpush1.bf16.msra.mxu0 0
  %127 = vmatprep.subr.bf16.mxu0 0
  %128 = vmatpush1.bf16.msra.mxu0 %v109
  %129 = vmatprep.subr.bf16.mxu0 0
  %130 = vmatpush1.bf16.msra.mxu0 %v108
  %131 = vmatprep.subr.bf16.mxu0 0
  %132 = vmatpush2.bf16.msra.mxu0 0
  %133 = vmatprep.subr.bf16.mxu0 0
  %134 = vmatpush2.bf16.msra.mxu0 0
  %135 = vmatprep.subr.bf16.mxu0 0
  %136 = vmatpush2.bf16.msra.mxu0 0
  %137 = vmatprep.subr.bf16.mxu0 0
  %138 = vmatpush2.bf16.msra.mxu0 0
  %139 = vmatprep.subr.bf16.mxu0 0
  %140 = vmatpush2.bf16.msra.mxu0 0
  %141 = vmatprep.subr.bf16.mxu0 0
  %142 = vmatpush2.bf16.msra.mxu0 0
  %143 = vmatprep.subr.bf16.mxu0 0
  %144 = vmatpush2.bf16.msra.mxu0 0
  %145 = vmatprep.subr.bf16.mxu0 0
  %146 = vmatpush2.bf16.msra.mxu0 0
  %147 = vmatprep.mubr.bf16.mxu0 0
  %148 = vmatmul.mubr.bf16.gmra.mxu0 %v113
  %v149 = vpop.f32.mrf.mxu0
  %v150 = vadd.f32 0.0, %v149
  %v151 = vpop.f32.mrf.mxu0
  %v152 = vpop.f32.mrf.mxu0
  %v153 = vpop.f32.mrf.mxu0
  %154 = vdwg.mxu0
  %v155 = vsub.f32 %v95, %v150
  %v156 = vadd.f32 %v43, %v155
  %157 = vst.msk [vmem:[#allocation2] sm:$0xff] %vm56, %v156
  %v158 = vld [vmem:[#allocation3] sm:$0xff]
  %159 = vmatprep.subr.bf16.mxu0 0
  %160 = vmatpush1.bf16.msra.mxu0 0
  %161 = vmatprep.subr.bf16.mxu0 0
  %162 = vmatpush1.bf16.msra.mxu0 0
  %163 = vmatprep.subr.bf16.mxu0 0
  %164 = vmatpush1.bf16.msra.mxu0 0
  %165 = vmatprep.subr.bf16.mxu0 0
  %166 = vmatpush1.bf16.msra.mxu0 0
  %167 = vmatprep.subr.bf16.mxu0 0
  %168 = vmatpush1.bf16.msra.mxu0 0
  %169 = vmatprep.subr.bf16.mxu0 0
  %170 = vmatpush1.bf16.msra.mxu0 0
  %171 = vmatprep.subr.bf16.mxu0 0
  %172 = vmatpush1.bf16.msra.mxu0 %v53
  %173 = vmatprep.subr.bf16.mxu0 0
  %174 = vmatpush1.bf16.msra.mxu0 %v52
  %175 = vmatprep.subr.bf16.mxu0 0
  %176 = vmatpush2.bf16.msra.mxu0 0
  %177 = vmatprep.subr.bf16.mxu0 0
  %178 = vmatpush2.bf16.msra.mxu0 0
  %179 = vmatprep.subr.bf16.mxu0 0
  %180 = vmatpush2.bf16.msra.mxu0 0
  %181 = vmatprep.subr.bf16.mxu0 0
  %182 = vmatpush2.bf16.msra.mxu0 0
  %183 = vmatprep.subr.bf16.mxu0 0
  %184 = vmatpush2.bf16.msra.mxu0 0
  %185 = vmatprep.subr.bf16.mxu0 0
  %186 = vmatpush2.bf16.msra.mxu0 0
  %187 = vmatprep.subr.bf16.mxu0 0
  %188 = vmatpush2.bf16.msra.mxu0 0
  %189 = vmatprep.subr.bf16.mxu0 0
  %190 = vmatpush2.bf16.msra.mxu0 0
  %191 = vmatprep.mubr.bf16.mxu0 0
  %192 = vmatmul.mubr.bf16.gmra.mxu0 %v113
  %v193 = vpop.f32.mrf.mxu0
  %v194 = vadd.f32 0.0, %v193
  %v195 = vpop.f32.mrf.mxu0
  %v196 = vpop.f32.mrf.mxu0
  %v197 = vpop.f32.mrf.mxu0
  %198 = vdwg.mxu0
  %199 = vmatprep.subr.bf16.mxu0 0
  %200 = vmatpush1.bf16.msra.mxu0 0
  %201 = vmatprep.subr.bf16.mxu0 0
  %202 = vmatpush1.bf16.msra.mxu0 0
  %203 = vmatprep.subr.bf16.mxu0 0
  %204 = vmatpush1.bf16.msra.mxu0 0
  %205 = vmatprep.subr.bf16.mxu0 0
  %206 = vmatpush1.bf16.msra.mxu0 0
  %207 = vmatprep.subr.bf16.mxu0 0
  %208 = vmatpush1.bf16.msra.mxu0 0
  %209 = vmatprep.subr.bf16.mxu0 0
  %210 = vmatpush1.bf16.msra.mxu0 0
  %211 = vmatprep.subr.bf16.mxu0 0
  %212 = vmatpush1.bf16.msra.mxu0 %v109
  %213 = vmatprep.subr.bf16.mxu0 0
  %214 = vmatpush1.bf16.msra.mxu0 %v108
  %215 = vmatprep.subr.bf16.mxu0 0
  %216 = vmatpush2.bf16.msra.mxu0 0
  %217 = vmatprep.subr.bf16.mxu0 0
  %218 = vmatpush2.bf16.msra.mxu0 0
  %219 = vmatprep.subr.bf16.mxu0 0
  %220 = vmatpush2.bf16.msra.mxu0 0
  %221 = vmatprep.subr.bf16.mxu0 0
  %222 = vmatpush2.bf16.msra.mxu0 0
  %223 = vmatprep.subr.bf16.mxu0 0
  %224 = vmatpush2.bf16.msra.mxu0 0
  %225 = vmatprep.subr.bf16.mxu0 0
  %226 = vmatpush2.bf16.msra.mxu0 0
  %227 = vmatprep.subr.bf16.mxu0 0
  %228 = vmatpush2.bf16.msra.mxu0 0
  %229 = vmatprep.subr.bf16.mxu0 0
  %230 = vmatpush2.bf16.msra.mxu0 0
  %231 = vmatprep.mubr.bf16.mxu0 0
  %232 = vmatmul.mubr.bf16.gmra.mxu0 %v58
  %v233 = vpop.f32.mrf.mxu0
  %v234 = vadd.f32 %v194, %v233
  %v235 = vpop.f32.mrf.mxu0
  %v236 = vpop.f32.mrf.mxu0
  %v237 = vpop.f32.mrf.mxu0
  %238 = vdwg.mxu0
  %v239 = vadd.f32 %v158, %v234
  %240 = vst.msk [vmem:[#allocation3] sm:$0xff] %vm56, %v239
  // Predicated region
  $region30: #{neural_network_model_forward.1} parent=0 // pred_check
    %p241 = pneg %p26
  $region31: #{neural_network_model_forward.1} parent=0 // pred_check_branch
    %243 = sbr.rel (%p241) target = $region33
  $region32: #{neural_network_model_forward.1} parent=0 // pred_region
    %v244 = vld [vmem:[#allocation2] sm:$0xff]
    %v245 = vld [vmem:[%s4] sm:$0x1]
    %v247 = vlaneseq
    %v248 = vshrl.u32 %v247, 7
    %v249 = vsub.s32 0, %v248
    %v250 = vrot.slane %v245, %v249
    %v252 = vadd.f32 %v244, %v250
    %v253 = vld [vmem:[#allocation3] sm:$0xff]
    %v254 = vld [vmem:[%s5] sm:$0x1]
    %v256 = vlaneseq
    %v257 = vshrl.u32 %v256, 7
    %v258 = vsub.s32 0, %v257
    %v259 = vrot.slane %v254, %v258
    %v261 = vadd.f32 %v253, %v259
    %v262 = vand.u32 2147483647, %v252
    %v263 = vsub.f32 0.0, %v262
    %v264 = vmul.f32 %v263, 1.442695
    %v265 = vpow.pop %v264
    %v266 = vand.u32 2147483647, %v261
    %vm267 = vcmp.le.f32.partialorder %v266, 0.7853982
    %vm268 = vcmp.lt.s32.totalorder %v261, 0
    %v269 = vand.u32 %v261, 2139095040
    %v270 = vshrl.u32 %v269, 23
    %v271 = vsub.s32 %v270, 127
    %v272 = vand.u32 2147483647, %v261
    %v273 = vand.u32 %v272, 8388607
    %v274 = vor.u32 %v273, 8388608
    %v275 = vsub.s32 0, %v274
    %v276 = vadd.s32 %v271, 1
    %vm277 = vcmp.gt.s32.totalorder %v276, 0
    %v278 = vsel %vm277, %v276, 0
    %v279 = vshrl.u32 %v278, 5
    %v280 = vand.u32 %v278, 31
    %v281 = vsub.s32 32, %v280
    %v282 = vshrl.u32 683565275, %v281
    %v283 = vshll.u32 683565275, %v280
    %v284 = vshrl.u32 2475754826, %v281
    %v285 = vor.u32 %v283, %v284
    %v286 = vshll.u32 2475754826, %v280
    %v287 = vshrl.u32 2131351028, %v281
    %v288 = vor.u32 %v286, %v287
    %v289 = vshll.u32 2131351028, %v280
    %v290 = vshrl.u32 2102212464, %v281
    %v291 = vor.u32 %v289, %v290
    %v292 = vshll.u32 2102212464, %v280
    %v293 = vshrl.u32 920167782, %v281
    %v294 = vor.u32 %v292, %v293
    %v295 = vshll.u32 920167782, %v280
    %v296 = vshrl.u32 1326507024, %v281
    %v297 = vor.u32 %v295, %v296
    %vm298 = vcmp.lt.s32.totalorder %v279, 1
    %vm299 = vcmp.lt.s32.totalorder %v279, 2
    %vm300 = vcmp.lt.s32.totalorder %v279, 3
    %vm301 = vcmp.lt.s32.totalorder %v279, 4
    %v302 = vsel %vm298, %v282, %v285
    %v303 = vsel %vm301, %v291, 2102212464
    %v304 = vsel %vm300, %v288, %v303
    %v305 = vsel %vm299, %v302, %v304
    %v306 = vsel %vm298, %v285, %v288
    %v307 = vsel %vm301, %v294, 920167782
    %v308 = vsel %vm300, %v291, %v307
    %v309 = vsel %vm299, %v306, %v308
    %v310 = vsel %vm298, %v288, %v291
    %v311 = vsel %vm301, %v297, 1326507024
    %v312 = vsel %vm300, %v294, %v311
    %v313 = vsel %vm299, %v310, %v312
    %v314 = vshll.u32 %v274, 8
    %v315 = vmul.u32.u64.compose %v314, %v313
    %v316 = vextract.low.u32 %v315
    %v317 = vextract.high.u32 %v315
    %v318 = vmul.u32.u64.compose %v314, %v309
    %v319 = vextract.low.u32 %v318
    %v320 = vextract.high.u32 %v318
    %v321 = vmul.u32 %v314, %v305
    %v322 = vadd.s32 %v317, %v319
    %vm323 = vc.u32 %v317, %v319
    %v324 = vadd.s32 %v320, 1
    %v325 = vsel %vm323, %v324, %v320
    %v326 = vadd.s32 %v321, %v325
    %v327 = vadd.s32 %v326, 536870912
    %v328 = vshrl.u32 %v327, 30
    %v329 = vshll.u32 %v328, 30
    %v330 = vsub.s32 %v326, %v329
    %vm331 = vcmp.lt.s32.totalorder %v330, 0
    %v332 = vsub.s32 0, %v330
    %v333 = vsel %vm331, %v332, %v330
    %v334 = vclz %v333
    %v335 = vsub.s32 %v334, 2
    %vm336 = vcmp.gt.s32.totalorder 0, %v335
    %v337 = vsel %vm336, 0, %v335
    %v338 = vsub.s32 32, %v337
    %v339 = vshll.u32 %v330, %v337
    %v340 = vshrl.u32 %v322, %v338
    %v341 = vor.u32 %v339, %v340
    %v342 = vsub.s32 4294967266, %v337
    %v343 = vadd.s32 %v342, 127
    %v344 = vshll.u32 %v343, 23
    %v345 = vor.u32 4788187, %v344
    %v346 = vand.u32 2147483647, %v345
    %v348 = vcvt.s32.f32 %v341
    %v349 = vmul.f32 %v348, %v346
    %v350 = vxor.u32 %v349, 2147483648
    %v351 = vsel %vm268, %v350, %v349
    %v352 = vsub.s32 4, %v328
    %v353 = vsel %vm268, %v352, %v328
    %v354 = vsel %vm267, %v261, %v351
    %v355 = vsel %vm267, 0, %v353
    %v356 = vcosq.f32.pop %v354
    %v357 = vsinq.f32.pop %v354
    %vm358 = vweird.f32 %v261
    %v359 = vand.u32 %v355, 3
    %vm360 = vcmp.lt.s32.totalorder %v359, 2
    %vm361 = vcmp.eq.s32.totalorder %v359, 0
    %v362 = vxor.u32 %v357, 2147483648
    %v363 = vsel %vm361, %v356, %v362
    %vm364 = vcmp.eq.s32.totalorder %v359, 2
    %v365 = vxor.u32 %v356, 2147483648
    %v366 = vsel %vm364, %v365, %v357
    %v367 = vsel %vm360, %v363, %v366
    %v368 = vsel %vm358, nan, %v367
    %v369 = vand.u32 2147483647, %v261
    %vm370 = vcmp.le.f32.partialorder %v369, 0.7853982
    %vm371 = vcmp.lt.s32.totalorder %v261, 0
    %v372 = vand.u32 %v261, 2139095040
    %v373 = vshrl.u32 %v372, 23
    %v374 = vsub.s32 %v373, 127
    %v375 = vand.u32 2147483647, %v261
    %v376 = vand.u32 %v375, 8388607
    %v377 = vor.u32 %v376, 8388608
    %v378 = vsub.s32 0, %v377
    %v379 = vadd.s32 %v374, 1
    %vm380 = vcmp.gt.s32.totalorder %v379, 0
    %v381 = vsel %vm380, %v379, 0
    %v382 = vshrl.u32 %v381, 5
    %v383 = vand.u32 %v381, 31
    %v384 = vsub.s32 32, %v383
    %v385 = vshrl.u32 683565275, %v384
    %v386 = vshll.u32 683565275, %v383
    %v387 = vshrl.u32 2475754826, %v384
    %v388 = vor.u32 %v386, %v387
    %v389 = vshll.u32 2475754826, %v383
    %v390 = vshrl.u32 2131351028, %v384
    %v391 = vor.u32 %v389, %v390
    %v392 = vshll.u32 2131351028, %v383
    %v393 = vshrl.u32 2102212464, %v384
    %v394 = vor.u32 %v392, %v393
    %v395 = vshll.u32 2102212464, %v383
    %v396 = vshrl.u32 920167782, %v384
    %v397 = vor.u32 %v395, %v396
    %v398 = vshll.u32 920167782, %v383
    %v399 = vshrl.u32 1326507024, %v384
    %v400 = vor.u32 %v398, %v399
    %vm401 = vcmp.lt.s32.totalorder %v382, 1
    %vm402 = vcmp.lt.s32.totalorder %v382, 2
    %vm403 = vcmp.lt.s32.totalorder %v382, 3
    %vm404 = vcmp.lt.s32.totalorder %v382, 4
    %v405 = vsel %vm401, %v385, %v388
    %v406 = vsel %vm404, %v394, 2102212464
    %v407 = vsel %vm403, %v391, %v406
    %v408 = vsel %vm402, %v405, %v407
    %v409 = vsel %vm401, %v388, %v391
    %v410 = vsel %vm404, %v397, 920167782
    %v411 = vsel %vm403, %v394, %v410
    %v412 = vsel %vm402, %v409, %v411
    %v413 = vsel %vm401, %v391, %v394
    %v414 = vsel %vm404, %v400, 1326507024
    %v415 = vsel %vm403, %v397, %v414
    %v416 = vsel %vm402, %v413, %v415
    %v417 = vshll.u32 %v377, 8
    %v418 = vmul.u32.u64.compose %v417, %v416
    %v419 = vextract.low.u32 %v418
    %v420 = vextract.high.u32 %v418
    %v421 = vmul.u32.u64.compose %v417, %v412
    %v422 = vextract.low.u32 %v421
    %v423 = vextract.high.u32 %v421
    %v424 = vmul.u32 %v417, %v408
    %v425 = vadd.s32 %v420, %v422
    %vm426 = vc.u32 %v420, %v422
    %v427 = vadd.s32 %v423, 1
    %v428 = vsel %vm426, %v427, %v423
    %v429 = vadd.s32 %v424, %v428
    %v430 = vadd.s32 %v429, 536870912
    %v431 = vshrl.u32 %v430, 30
    %v432 = vshll.u32 %v431, 30
    %v433 = vsub.s32 %v429, %v432
    %vm434 = vcmp.lt.s32.totalorder %v433, 0
    %v435 = vsub.s32 0, %v433
    %v436 = vsel %vm434, %v435, %v433
    %v437 = vclz %v436
    %v438 = vsub.s32 %v437, 2
    %vm439 = vcmp.gt.s32.totalorder 0, %v438
    %v440 = vsel %vm439, 0, %v438
    %v441 = vsub.s32 32, %v440
    %v442 = vshll.u32 %v433, %v440
    %v443 = vshrl.u32 %v425, %v441
    %v444 = vor.u32 %v442, %v443
    %v445 = vsub.s32 4294967266, %v440
    %v446 = vadd.s32 %v445, 127
    %v447 = vshll.u32 %v446, 23
    %v448 = vor.u32 4788187, %v447
    %v449 = vand.u32 2147483647, %v448
    %v451 = vcvt.s32.f32 %v444
    %v452 = vmul.f32 %v451, %v449
    %v453 = vxor.u32 %v452, 2147483648
    %v454 = vsel %vm371, %v453, %v452
    %v455 = vsub.s32 4, %v431
    %v456 = vsel %vm371, %v455, %v431
    %v457 = vsel %vm370, %v261, %v454
    %v458 = vsel %vm370, 0, %v456
    %v459 = vcosq.f32.pop %v457
    %v460 = vsinq.f32.pop %v457
    %vm461 = vweird.f32 %v261
    %v462 = vadd.s32 %v458, 3
    %v463 = vand.u32 %v462, 3
    %vm464 = vcmp.lt.s32.totalorder %v463, 2
    %vm465 = vcmp.eq.s32.totalorder %v463, 0
    %v466 = vxor.u32 %v460, 2147483648
    %v467 = vsel %vm465, %v459, %v466
    %vm468 = vcmp.eq.s32.totalorder %v463, 2
    %v469 = vxor.u32 %v459, 2147483648
    %v470 = vsel %vm468, %v469, %v460
    %v471 = vsel %vm464, %v467, %v470
    %v472 = vsel %vm461, nan, %v471
    %v473 = vmul.f32 %v265, %v368
    %v474 = vmul.f32 %v473, 2.0
    %v475 = vadd.f32 %v474, 1.0
    %v476 = vmul.f32 %v265, %v265
    %v477 = vadd.f32 %v475, %v476
    %v478 = vrcp.pop %v477
    %vm479 = vcmp.ge.f32.partialorder %v252, 0.0
    %v480 = vsel %vm479, 1.0, %v476
    %v481 = vadd.f32 %v480, %v473
    %v482 = vmul.f32 %v481, %v478
    %483 = vst.msk [vmem:[%s6] sm:$0xff] %vm56, %v482
    %v484 = vmul.f32 %v265, %v472
    %v485 = vmul.f32 %v484, %v478
    %486 = vst.msk [vmem:[%s7] sm:$0xff] %vm56, %v485
  $region33: #{neural_network_model_forward.1} parent=0 // pred_fallthru
    _
  // Predicated region
  $region34: #{neural_network_model_forward.1} parent=0 // pred_check
    _
  $region35: #{neural_network_model_forward.1} parent=0 // pred_check_branch
    %488 = sbr.rel (0) target = $region37
  $region36: #{neural_network_model_forward.1} parent=0 // pred_region
    _
  $region37: #{neural_network_model_forward.1} parent=0 // pred_fallthru
    _
  // Predicated region
  $region38: #{neural_network_model_forward.1} parent=0 // pred_check
    _
  $region39: #{neural_network_model_forward.1} parent=0 // pred_check_branch
    %490 = sbr.rel (0) target = $region41
  $region40: #{neural_network_model_forward.1} parent=0 // pred_region
    _
  $region41: #{neural_network_model_forward.1} parent=0 // pred_fallthru
    _
  // Predicated region
  $region42: #{neural_network_model_forward.1} parent=0 // pred_check
    _
  $region43: #{neural_network_model_forward.1} parent=0 // pred_check_branch
    %492 = sbr.rel (0) target = $region45
  $region44: #{neural_network_model_forward.1} parent=0 // pred_region
    _
  $region45: #{neural_network_model_forward.1} parent=0 // pred_fallthru
    _
  // Predicated region
  $region46: #{neural_network_model_forward.1} parent=0 // pred_check
    _
  $region47: #{neural_network_model_forward.1} parent=0 // pred_check_branch
    %494 = sbr.rel (0) target = $region49
  $region48: #{neural_network_model_forward.1} parent=0 // pred_region
    _
  $region49: #{neural_network_model_forward.1} parent=0 // pred_fallthru
    _

</llo_original>
